<compile_context>
chip_gen: v7x
topology: tpu7x:2x2x1
jax: 0.10.0
libtpu: 0.0.40
codegen_flags: <defaults>
</compile_context>

<pallas_src>
import math

import jax
import jax.numpy as jnp
from jax import lax
from jax.experimental import pallas as pl
from jax.experimental.pallas import tpu as pltpu


def _build_pe_table(embedding_dim: int, max_length: int = 512) -> jnp.ndarray:
    """Sinusoidal table identical to the PyTorch __init__ -> (max_length, 1, D), f32.

    Kept for reference/validation; the kernel itself recomputes pe on the fly.
    """
    position = jnp.arange(0, max_length, dtype=jnp.float32)[:, None]          # (L, 1)
    div_term = jnp.exp(
        jnp.arange(0, embedding_dim, 2, dtype=jnp.float32)
        * (-math.log(10000.0) / embedding_dim)
    )                                                                          # (D/2,)
    angles = position * div_term                                               # (L, D/2)
    pe = jnp.zeros((max_length, embedding_dim), dtype=jnp.float32)
    pe = pe.at[:, 0::2].set(jnp.sin(angles))
    pe = pe.at[:, 1::2].set(jnp.cos(angles))
    return pe[:, None, :]                                                      # (L, 1, D)


def _round_up(v: int, m: int) -> int:
    return ((v + m - 1) // m) * m


def _choose_tiles(S: int, C: int, itemsize: int,
                  vmem_budget_bytes: int = 24 << 20,
                  megacore_min_bytes: int = 8 << 20):
    """Pick (ts, tc) for the flattened (S, C=B*D) view.

    Budget is the double-buffered working set (x-in + out blocks); 24 MiB is
    large enough to reach ~85%+ of HBM roofline on v5e/v6e while staying well
    inside v7x's 64 MiB physical VMEM, and fits under the 32 MiB limit we
    request from the compiler.
    """
    sub = max(8, 32 // itemsize)    # sublane packing unit: f32->8, bf16->16, int8->32
    lane = 128

    def live_bytes(ts, tc):
        # double-buffered x-in + out blocks, plus the two tiny (1, tc) f32 rows
        return 2 * 2 * ts * tc * itemsize + 2 * 2 * tc * 4

    ts, tc = S, C
    # Shrink the sequence axis first: every DMA row stays a full tc-contiguous burst.
    while live_bytes(ts, tc) > vmem_budget_bytes and ts > sub:
        ts = max(sub, _round_up(ts // 2, sub))
    # Only then split the flattened batch*embedding axis, in lane-aligned chunks.
    while live_bytes(ts, tc) > vmem_budget_bytes and tc > lane:
        tc = max(lane, _round_up(tc // 2, lane))

    # v7x megacore: give the leading "parallel" axis >= 4 steps so both
    # TensorCores get work -- but only when the tensor is big enough that the
    # ~0.35 us/step pipeline overhead is negligible (a single big block wins
    # on the 1-TC chips / small inputs).
    if (2 * S * C * itemsize >= megacore_min_bytes
            and S >= 4 * sub and pl.cdiv(S, ts) < 4):
        ts = max(sub, (S // 4) // sub * sub)

    return ts, tc


def fixed_positional_encoding(x: jnp.ndarray, max_length: int = 512) -> jnp.ndarray:
    """x: (S, B, D). Returns x + pe[:S] (broadcast over batch) in x.dtype."""
    S, B, D = x.shape
    if S > max_length:
        raise ValueError(f"seq_len {S} exceeds max_length {max_length}")
    if D % 2 != 0:
        raise ValueError("embedding_dim must be even (same restriction as the "
                         "PyTorch module's sin/cos interleave)")

    C = B * D
    x_flat = x.reshape(S, C)                         # free: contiguous row-major
    itemsize = jnp.dtype(x.dtype).itemsize
    ts, tc = _choose_tiles(S, C, itemsize)
    grid = (pl.cdiv(S, ts), pl.cdiv(C, tc))

    # Per-column constants in f32, tiled across the B replicas of the flattened
    # layout: freq[c] = exp(-ln(1e4) * (d - d%2) / D) and parity[c] = d % 2 with
    # d = c % D.  These O(C)-byte rows replace the O(S*D) pe read from HBM.
    d = jnp.arange(D, dtype=jnp.int32)
    par_d = d % 2
    freq_d = jnp.exp((d - par_d).astype(jnp.float32) * (-math.log(10000.0) / D))
    freq_row = jnp.tile(freq_d, (B,)).reshape(1, C).astype(jnp.float32)
    parity_row = jnp.tile(par_d.astype(jnp.float32), (B,)).reshape(1, C)

    def _kernel(x_ref, freq_ref, par_ref, o_ref):
        # Absolute sequence position of every row in this block.
        base = (pl.program_id(0) * ts).astype(jnp.float32)
        pos = base + lax.broadcasted_iota(jnp.int32, (ts, tc), 0).astype(jnp.float32)
        angle = pos * freq_ref[...]                          # (ts,tc) * (1,tc)
        par = jnp.broadcast_to(par_ref[...], (ts, tc))
        # EUP transcendentals + VPU select: free slots in a memory-bound kernel.
        pe = jnp.where(par == 0.0, jnp.sin(angle), jnp.cos(angle))
        # Native-dtype add (no f32 upcast of x), explicit cast on the store.
        o_ref[...] = (x_ref[...] + pe.astype(x_ref.dtype)).astype(o_ref.dtype)

    cost = pl.CostEstimate(
        flops=2 * S * C,
        transcendentals=S * C,
        bytes_accessed=2 * S * C * itemsize + 2 * C * 4,
    )

    out_flat = pl.pallas_call(
        _kernel,
        out_shape=jax.ShapeDtypeStruct((S, C), x.dtype),
        grid_spec=pltpu.PrefetchScalarGridSpec(
            num_scalar_prefetch=0,
            grid=grid,
            in_specs=[
                pl.BlockSpec((ts, tc), lambda i, j: (i, j)),      # x (lane-dense)
                pl.BlockSpec((1, tc), lambda i, j: (0, j)),       # freq row
                pl.BlockSpec((1, tc), lambda i, j: (0, j)),       # parity row
            ],
            out_specs=pl.BlockSpec((ts, tc), lambda i, j: (i, j)),
        ),
        compiler_params=pltpu.CompilerParams(
            # No reduction axis: both grid axes are independent -> megacore can
            # shard them across TensorCores; harmless on single-TC chips.
            dimension_semantics=("parallel", "parallel"),
            # Above v5e's 16 MiB scoped default so the 24 MiB tile budget is
            # usable; equal to v6e/v7x defaults and well under v7x's 64 MiB
            # physical VMEM.
            vmem_limit_bytes=32 << 20,
        ),
        cost_estimate=cost,
        # Elementwise add with identical in/out shape+dtype: donate x.
        input_output_aliases={0: 0},
    )(x_flat, freq_row, parity_row)

    return out_flat.reshape(S, B, D)


if __name__ == "__main__":
    seq_len, batch, embedding_dim = 8, 2, 32
    max_length = 512

    key = jax.random.PRNGKey(0)
    x = jax.random.normal(key, (seq_len, batch, embedding_dim), dtype=jnp.float32)

    # Reference (same formula as the PyTorch buffer), computed before the
    # kernel call since x is donated to the pallas_call.
    pe_full = _build_pe_table(embedding_dim, max_length)
    ref = x + pe_full[:seq_len]

    out = fixed_positional_encoding(x, max_length=max_length)
    out = jax.block_until_ready(out)

    assert out.shape == (seq_len, batch, embedding_dim)
    assert out.dtype == x.dtype
    assert jnp.allclose(out, ref, atol=1e-5, rtol=1e-5), "mismatch vs reference"

    print("KERNEL_OK")
</pallas_src>

<mosaic_0001>
module attributes {stable_mosaic.version = 11 : i64} {
  func.func @_kernel(%arg0: i32, %arg1: i32, %arg2: memref<8x64xf32, #tpu.memory_space<vmem>>, %arg3: memref<1x64xf32, #tpu.memory_space<vmem>>, %arg4: memref<1x64xf32, #tpu.memory_space<vmem>>, %arg5: memref<8x64xf32, #tpu.memory_space<vmem>>) attributes {dimension_semantics = [#tpu.dimension_semantics<parallel>, #tpu.dimension_semantics<parallel>], iteration_bounds = array<i64: 1, 1>, scalar_prefetch = 0 : i64, scratch_operands = 0 : i64, tpu.core_type = #tpu.core_type<tc>, window_params = [{transform_indices = @transform_0, window_bounds = array<i64: 8, 64>}, {transform_indices = @transform_1, window_bounds = array<i64: 1, 64>}, {transform_indices = @transform_2, window_bounds = array<i64: 1, 64>}, {transform_indices = @transform_3, window_bounds = array<i64: 8, 64>}]} {
    %c8_i32 = arith.constant 8 : i32
    %0 = arith.muli %arg0, %c8_i32 : i32
    %1 = arith.sitofp %0 : i32 to f32
    %2 = tpu.iota {dimensions = array<i32: 0>} : vector<8x64xi32>
    %3 = arith.sitofp %2 : vector<8x64xi32> to vector<8x64xf32>
    %4 = vector.broadcast %1 : f32 to vector<8x64xf32>
    %5 = arith.addf %4, %3 : vector<8x64xf32>
    %c0 = arith.constant 0 : index
    %c0_0 = arith.constant 0 : index
    %6 = vector.load %arg3[%c0, %c0_0] : memref<1x64xf32, #tpu.memory_space<vmem>>, vector<1x64xf32>
    %7 = vector.broadcast %6 : vector<1x64xf32> to vector<8x64xf32>
    %8 = arith.mulf %5, %7 : vector<8x64xf32>
    %c0_1 = arith.constant 0 : index
    %c0_2 = arith.constant 0 : index
    %9 = vector.load %arg4[%c0_1, %c0_2] : memref<1x64xf32, #tpu.memory_space<vmem>>, vector<1x64xf32>
    %10 = vector.shape_cast %9 : vector<1x64xf32> to vector<1x64xf32>
    %11 = vector.broadcast %10 : vector<1x64xf32> to vector<8x64xf32>
    %cst = arith.constant 0.000000e+00 : f32
    %12 = vector.broadcast %cst : f32 to vector<8x64xf32>
    %13 = arith.cmpf oeq, %11, %12 : vector<8x64xf32>
    %14 = math.sin %8 : vector<8x64xf32>
    %15 = math.cos %8 : vector<8x64xf32>
    %16 = arith.select %13, %14, %15 : vector<8x64xi1>, vector<8x64xf32>
    %c0_3 = arith.constant 0 : index
    %c0_4 = arith.constant 0 : index
    %17 = vector.load %arg2[%c0_3, %c0_4] : memref<8x64xf32, #tpu.memory_space<vmem>>, vector<8x64xf32>
    %18 = arith.addf %17, %16 : vector<8x64xf32>
    %c0_5 = arith.constant 0 : index
    %c0_6 = arith.constant 0 : index
    %19 = vector.load %arg5[%c0_5, %c0_6] : memref<8x64xf32, #tpu.memory_space<vmem>>, vector<8x64xf32>
    tpu.vector_store %arg5[%c0_5, %c0_6], %18 {strides = array<i32>} : memref<8x64xf32, #tpu.memory_space<vmem>>, vector<8x64xf32>,
    return
  }
  func.func @transform_0(%arg0: i32, %arg1: i32) -> (i32, i32) {
    %c0_i32 = arith.constant 0 : i32
    return %arg0, %arg1 : i32, i32
  }
  func.func @transform_1(%arg0: i32, %arg1: i32) -> (i32, i32) {
    %c0_i32 = arith.constant 0 : i32
    %c0_i32_0 = arith.constant 0 : i32
    return %c0_i32, %arg1 : i32, i32
  }
  func.func @transform_2(%arg0: i32, %arg1: i32) -> (i32, i32) {
    %c0_i32 = arith.constant 0 : i32
    %c0_i32_0 = arith.constant 0 : i32
    return %c0_i32, %arg1 : i32, i32
  }
  func.func @transform_3(%arg0: i32, %arg1: i32) -> (i32, i32) {
    %c0_i32 = arith.constant 0 : i32
    return %arg0, %arg1 : i32, i32
  }
}

</mosaic_0001>

<llo_original>
// kernel: tpu_custom_call.1
$region0: #{tpu_custom_call.1}
  #allocation0 [shape = 'u32[]', space=smem, size = 0x4, offset = 0x4, fixed_abs, tag = 'smem constant byte address 0x4 - core index']
  #allocation1 [shape = 'u32[144,128]{1,0:T(1,128)}', space=vmem, size = 0x12000, scoped, tag = 'internal scratch']
  %s0 = inlined_call_operand.hbm [shape: f32[8,64], index: 0, kind: input, shape index: {}, may-alias: {0,3}]
  %s1 = inlined_call_operand.vmem [shape: f32[1,64], index: 1, kind: input, shape index: {}]
  %s2 = inlined_call_operand.vmem [shape: f32[1,64], index: 2, kind: input, shape index: {}]
  %s3 = inlined_call_operand.hbm [shape: f32[8,64], index: 3, kind: output, shape index: {}, may-alias: {0,3}]
  %s4 = sld [smem:[#allocation0]]
  $region26: #{tpu_custom_call.1} parent=0
    _
  %s6 = ssub.s32 1, %s4
  %s7 = scalar_select 0, %s6, %s4
  $region1: #{tpu_custom_call.1} parent=0
    #allocation2 [shape = 'u8[4096]{0}', space=vmem, size = 0x1000, scoped, tag = 'input window, operand 0, single buffered']
    #allocation3 [shape = 's32[1]{0}', space=sflag, size = 0x4, scoped, tag = 'scoped memory for tpu_custom_call.1']
    #allocation4 [shape = 's32[1]{0}', space=sflag, size = 0x4, scoped, tag = 'scoped memory for tpu_custom_call.1']
    #allocation5 [shape = 'u8[4096]{0}', space=vmem, size = 0x1000, scoped, tag = 'output window, operand 0, single buffered']
    %8 = vsyncpa [#allocation3], 0
    %9 = vsyncpa [#allocation4], 0
    // Predicated region
    $region2: #{tpu_custom_call.1} parent=1 // pred_check
      _
    $region3: #{tpu_custom_call.1} parent=1 // pred_check_branch
      %11 = sbr.rel (0) target = $region5
    $region4: #{tpu_custom_call.1} parent=1 // pred_region
      %s13 = ssub.s32 128, 128
      %14 = vsyncadd [#allocation3], %s13
      %s16 = sshll.u32 [#allocation2], 4
      %s17 = int_to_ptr.vmem [resolvable:$true] %s16
      %19 = dma.hbm_to_vmem [thread:$0]  %s0, 128, %s17, [#allocation3]
    $region5: #{tpu_custom_call.1} parent=1 // pred_fallthru
      _
    // Predicated region
    $region6: #{tpu_custom_call.1} parent=1 // pred_check
      _
    $region7: #{tpu_custom_call.1} parent=1 // pred_check_branch
      %21 = sbr.rel (0) target = $region9
    $region8: #{tpu_custom_call.1} parent=1 // pred_region
      _
    $region9: #{tpu_custom_call.1} parent=1 // pred_fallthru
      _
    // Predicated region
    $region10: #{tpu_custom_call.1} parent=1 // pred_check
      _
    $region11: #{tpu_custom_call.1} parent=1 // pred_check_branch
      %23 = sbr.rel (0) target = $region13
    $region12: #{tpu_custom_call.1} parent=1 // pred_region
      _
    $region13: #{tpu_custom_call.1} parent=1 // pred_fallthru
      _
    // Predicated region
    $region14: #{tpu_custom_call.1} parent=1 // pred_check
      _
    $region15: #{tpu_custom_call.1} parent=1 // pred_check_branch
      %25 = sbr.rel (0) target = $region17
    $region16: #{tpu_custom_call.1} parent=1 // pred_region
      %26 = dma.done [#allocation3], 128
    $region17: #{tpu_custom_call.1} parent=1 // pred_fallthru
      _
    %s27 = smul.u32 0, 8
    %s28 = scvt.s32.f32 %s27
    %v29 = vlaneseq
    %v30 = vshrl.u32 %v29, 7
    %v31 = vcvt.s32.f32 %v30
    %v32 = vstv %s28
    %v33 = vadd.f32 %v32, %v31
    %v34 = vld [vmem:[%s1] sm:$0x1]
    %v36 = vlaneseq
    %v37 = vshrl.u32 %v36, 7
    %v38 = vsub.s32 0, %v37
    %v39 = vrot.slane %v34, %v38
    %v41 = vmul.f32 %v33, %v39
    %v42 = vld [vmem:[%s2] sm:$0x1]
    %v44 = vlaneseq
    %v45 = vshrl.u32 %v44, 7
    %v46 = vsub.s32 0, %v45
    %v47 = vrot.slane %v42, %v46
    %vm49 = vcmp.eq.f32.partialorder %v47, 0.0
    %v50 = vand.u32 2147483647, %v41
    %vm51 = vcmp.le.f32.partialorder %v50, 0.7853982
    %vm52 = vcmp.lt.s32.totalorder %v41, 0
    %v53 = vand.u32 %v41, 2139095040
    %v54 = vshrl.u32 %v53, 23
    %v55 = vsub.s32 %v54, 127
    %v56 = vand.u32 2147483647, %v41
    %v57 = vand.u32 %v56, 8388607
    %v58 = vor.u32 %v57, 8388608
    %v59 = vsub.s32 0, %v58
    %v60 = vadd.s32 %v55, 1
    %vm61 = vcmp.gt.s32.totalorder %v60, 0
    %v62 = vsel %vm61, %v60, 0
    %v63 = vshrl.u32 %v62, 5
    %v64 = vand.u32 %v62, 31
    %v65 = vsub.s32 32, %v64
    %v66 = vshrl.u32 683565275, %v65
    %v67 = vshll.u32 683565275, %v64
    %v68 = vshrl.u32 2475754826, %v65
    %v69 = vor.u32 %v67, %v68
    %v70 = vshll.u32 2475754826, %v64
    %v71 = vshrl.u32 2131351028, %v65
    %v72 = vor.u32 %v70, %v71
    %v73 = vshll.u32 2131351028, %v64
    %v74 = vshrl.u32 2102212464, %v65
    %v75 = vor.u32 %v73, %v74
    %v76 = vshll.u32 2102212464, %v64
    %v77 = vshrl.u32 920167782, %v65
    %v78 = vor.u32 %v76, %v77
    %v79 = vshll.u32 920167782, %v64
    %v80 = vshrl.u32 1326507024, %v65
    %v81 = vor.u32 %v79, %v80
    %vm82 = vcmp.lt.s32.totalorder %v63, 1
    %vm83 = vcmp.lt.s32.totalorder %v63, 2
    %vm84 = vcmp.lt.s32.totalorder %v63, 3
    %vm85 = vcmp.lt.s32.totalorder %v63, 4
    %v86 = vsel %vm82, %v66, %v69
    %v87 = vsel %vm85, %v75, 2102212464
    %v88 = vsel %vm84, %v72, %v87
    %v89 = vsel %vm83, %v86, %v88
    %v90 = vsel %vm82, %v69, %v72
    %v91 = vsel %vm85, %v78, 920167782
    %v92 = vsel %vm84, %v75, %v91
    %v93 = vsel %vm83, %v90, %v92
    %v94 = vsel %vm82, %v72, %v75
    %v95 = vsel %vm85, %v81, 1326507024
    %v96 = vsel %vm84, %v78, %v95
    %v97 = vsel %vm83, %v94, %v96
    %v98 = vshll.u32 %v58, 8
    %v99 = vmul.u32.u64.compose %v98, %v97
    %v100 = vextract.low.u32 %v99
    %v101 = vextract.high.u32 %v99
    %v102 = vmul.u32.u64.compose %v98, %v93
    %v103 = vextract.low.u32 %v102
    %v104 = vextract.high.u32 %v102
    %v105 = vmul.u32 %v98, %v89
    %v106 = vadd.s32 %v101, %v103
    %vm107 = vc.u32 %v101, %v103
    %v108 = vadd.s32 %v104, 1
    %v109 = vsel %vm107, %v108, %v104
    %v110 = vadd.s32 %v105, %v109
    %v111 = vadd.s32 %v110, 536870912
    %v112 = vshrl.u32 %v111, 30
    %v113 = vshll.u32 %v112, 30
    %v114 = vsub.s32 %v110, %v113
    %vm115 = vcmp.lt.s32.totalorder %v114, 0
    %v116 = vsub.s32 0, %v114
    %v117 = vsel %vm115, %v116, %v114
    %v118 = vclz %v117
    %v119 = vsub.s32 %v118, 2
    %vm120 = vcmp.gt.s32.totalorder 0, %v119
    %v121 = vsel %vm120, 0, %v119
    %v122 = vsub.s32 32, %v121
    %v123 = vshll.u32 %v114, %v121
    %v124 = vshrl.u32 %v106, %v122
    %v125 = vor.u32 %v123, %v124
    %v126 = vsub.s32 4294967266, %v121
    %v127 = vadd.s32 %v126, 127
    %v128 = vshll.u32 %v127, 23
    %v129 = vor.u32 4788187, %v128
    %v130 = vand.u32 2147483647, %v129
    %v132 = vcvt.s32.f32 %v125
    %v133 = vmul.f32 %v132, %v130
    %v134 = vxor.u32 %v133, 2147483648
    %v135 = vsel %vm52, %v134, %v133
    %v136 = vsub.s32 4, %v112
    %v137 = vsel %vm52, %v136, %v112
    %v138 = vsel %vm51, %v41, %v135
    %v139 = vsel %vm51, 0, %v137
    %v140 = vcosq.f32.pop %v138
    %v141 = vsinq.f32.pop %v138
    %vm142 = vweird.f32 %v41
    %v143 = vadd.s32 %v139, 3
    %v144 = vand.u32 %v143, 3
    %vm145 = vcmp.lt.s32.totalorder %v144, 2
    %vm146 = vcmp.eq.s32.totalorder %v144, 0
    %v147 = vxor.u32 %v141, 2147483648
    %v148 = vsel %vm146, %v140, %v147
    %vm149 = vcmp.eq.s32.totalorder %v144, 2
    %v150 = vxor.u32 %v140, 2147483648
    %v151 = vsel %vm149, %v150, %v141
    %v152 = vsel %vm145, %v148, %v151
    %v153 = vsel %vm142, nan, %v152
    %v154 = vand.u32 2147483647, %v41
    %vm155 = vcmp.le.f32.partialorder %v154, 0.7853982
    %vm156 = vcmp.lt.s32.totalorder %v41, 0
    %v157 = vand.u32 %v41, 2139095040
    %v158 = vshrl.u32 %v157, 23
    %v159 = vsub.s32 %v158, 127
    %v160 = vand.u32 2147483647, %v41
    %v161 = vand.u32 %v160, 8388607
    %v162 = vor.u32 %v161, 8388608
    %v163 = vsub.s32 0, %v162
    %v164 = vadd.s32 %v159, 1
    %vm165 = vcmp.gt.s32.totalorder %v164, 0
    %v166 = vsel %vm165, %v164, 0
    %v167 = vshrl.u32 %v166, 5
    %v168 = vand.u32 %v166, 31
    %v169 = vsub.s32 32, %v168
    %v170 = vshrl.u32 683565275, %v169
    %v171 = vshll.u32 683565275, %v168
    %v172 = vshrl.u32 2475754826, %v169
    %v173 = vor.u32 %v171, %v172
    %v174 = vshll.u32 2475754826, %v168
    %v175 = vshrl.u32 2131351028, %v169
    %v176 = vor.u32 %v174, %v175
    %v177 = vshll.u32 2131351028, %v168
    %v178 = vshrl.u32 2102212464, %v169
    %v179 = vor.u32 %v177, %v178
    %v180 = vshll.u32 2102212464, %v168
    %v181 = vshrl.u32 920167782, %v169
    %v182 = vor.u32 %v180, %v181
    %v183 = vshll.u32 920167782, %v168
    %v184 = vshrl.u32 1326507024, %v169
    %v185 = vor.u32 %v183, %v184
    %vm186 = vcmp.lt.s32.totalorder %v167, 1
    %vm187 = vcmp.lt.s32.totalorder %v167, 2
    %vm188 = vcmp.lt.s32.totalorder %v167, 3
    %vm189 = vcmp.lt.s32.totalorder %v167, 4
    %v190 = vsel %vm186, %v170, %v173
    %v191 = vsel %vm189, %v179, 2102212464
    %v192 = vsel %vm188, %v176, %v191
    %v193 = vsel %vm187, %v190, %v192
    %v194 = vsel %vm186, %v173, %v176
    %v195 = vsel %vm189, %v182, 920167782
    %v196 = vsel %vm188, %v179, %v195
    %v197 = vsel %vm187, %v194, %v196
    %v198 = vsel %vm186, %v176, %v179
    %v199 = vsel %vm189, %v185, 1326507024
    %v200 = vsel %vm188, %v182, %v199
    %v201 = vsel %vm187, %v198, %v200
    %v202 = vshll.u32 %v162, 8
    %v203 = vmul.u32.u64.compose %v202, %v201
    %v204 = vextract.low.u32 %v203
    %v205 = vextract.high.u32 %v203
    %v206 = vmul.u32.u64.compose %v202, %v197
    %v207 = vextract.low.u32 %v206
    %v208 = vextract.high.u32 %v206
    %v209 = vmul.u32 %v202, %v193
    %v210 = vadd.s32 %v205, %v207
    %vm211 = vc.u32 %v205, %v207
    %v212 = vadd.s32 %v208, 1
    %v213 = vsel %vm211, %v212, %v208
    %v214 = vadd.s32 %v209, %v213
    %v215 = vadd.s32 %v214, 536870912
    %v216 = vshrl.u32 %v215, 30
    %v217 = vshll.u32 %v216, 30
    %v218 = vsub.s32 %v214, %v217
    %vm219 = vcmp.lt.s32.totalorder %v218, 0
    %v220 = vsub.s32 0, %v218
    %v221 = vsel %vm219, %v220, %v218
    %v222 = vclz %v221
    %v223 = vsub.s32 %v222, 2
    %vm224 = vcmp.gt.s32.totalorder 0, %v223
    %v225 = vsel %vm224, 0, %v223
    %v226 = vsub.s32 32, %v225
    %v227 = vshll.u32 %v218, %v225
    %v228 = vshrl.u32 %v210, %v226
    %v229 = vor.u32 %v227, %v228
    %v230 = vsub.s32 4294967266, %v225
    %v231 = vadd.s32 %v230, 127
    %v232 = vshll.u32 %v231, 23
    %v233 = vor.u32 4788187, %v232
    %v234 = vand.u32 2147483647, %v233
    %v236 = vcvt.s32.f32 %v229
    %v237 = vmul.f32 %v236, %v234
    %v238 = vxor.u32 %v237, 2147483648
    %v239 = vsel %vm156, %v238, %v237
    %v240 = vsub.s32 4, %v216
    %v241 = vsel %vm156, %v240, %v216
    %v242 = vsel %vm155, %v41, %v239
    %v243 = vsel %vm155, 0, %v241
    %v244 = vcosq.f32.pop %v242
    %v245 = vsinq.f32.pop %v242
    %vm246 = vweird.f32 %v41
    %v247 = vand.u32 %v243, 3
    %vm248 = vcmp.lt.s32.totalorder %v247, 2
    %vm249 = vcmp.eq.s32.totalorder %v247, 0
    %v250 = vxor.u32 %v245, 2147483648
    %v251 = vsel %vm249, %v244, %v250
    %vm252 = vcmp.eq.s32.totalorder %v247, 2
    %v253 = vxor.u32 %v244, 2147483648
    %v254 = vsel %vm252, %v253, %v245
    %v255 = vsel %vm248, %v251, %v254
    %v256 = vsel %vm246, nan, %v255
    %v257 = vsel %vm49, %v153, %v256
    %v258 = vld [vmem:[#allocation2] sm:$0xff]
    %v259 = vadd.f32 %v258, %v257
    %vm260 = vcmask 523264
    %261 = vst.msk [vmem:[#allocation5] sm:$0xff] %vm260, %v259
    // Predicated region
    $region18: #{tpu_custom_call.1} parent=1 // pred_check
      _
    $region19: #{tpu_custom_call.1} parent=1 // pred_check_branch
      %263 = sbr.rel (0) target = $region21
    $region20: #{tpu_custom_call.1} parent=1 // pred_region
      %s265 = ssub.s32 128, 128
      %266 = vsyncadd [#allocation4], %s265
      %s268 = sshll.u32 [#allocation5], 4
      %s269 = int_to_ptr.vmem [resolvable:$true] %s268
      %271 = dma.vmem_to_hbm [thread:$0]  %s269, 128, %s3, [#allocation4]
    $region21: #{tpu_custom_call.1} parent=1 // pred_fallthru
      _
    // Predicated region
    $region22: #{tpu_custom_call.1} parent=1 // pred_check
      _
    $region23: #{tpu_custom_call.1} parent=1 // pred_check_branch
      %273 = sbr.rel (0) target = $region25
    $region24: #{tpu_custom_call.1} parent=1 // pred_region
      %274 = dma.done [#allocation4], 128
    $region25: #{tpu_custom_call.1} parent=1 // pred_fallthru
      _
    %275 = vsyncpa [#allocation3], 1
    %276 = vsyncpa [#allocation4], 1

</llo_original>
